<compile_context>
chip_gen: v7x
topology: tpu7x:2x2x1
jax: 0.10.0
libtpu: 0.0.40
codegen_flags: <defaults>
</compile_context>

<pallas_src>
import functools

import jax
import jax.numpy as jnp
from jax.experimental import pallas as pl
from jax.experimental.pallas import tpu as pltpu

BN_EPS = 1e-5


def _round_up(a, m):
    return ((a + m - 1) // m) * m


def _pad2(a, rows, cols):
    r, c = a.shape
    return jnp.pad(a, ((0, rows - r), (0, cols - c)))


def global_sa_kernel(x_ref, pos_ref, bidx_ref,
                     w1x_ref, w1p_ref, b1_ref, w2_ref, b2_ref,
                     sc2_ref, sh2_ref, out_ref,
                     *, num_graphs, b_pad, apply_bn2_in_kernel):
    # Init the resident per-split max accumulator on the first N-tile.
    @pl.when(pl.program_id(1) == 0)
    def _init():
        out_ref[...] = jnp.full(out_ref.shape, -jnp.inf, out_ref.dtype)

    # Layer 1: Linear (x / pos split avoids a host-side concat) + ReLU.
    # (BN1 has been folded into w2/b2 on the host.)
    z1 = jnp.dot(x_ref[...], w1x_ref[...], preferred_element_type=jnp.float32)
    z1 = z1 + jnp.dot(pos_ref[...], w1p_ref[...], preferred_element_type=jnp.float32)
    z1 = jnp.maximum(z1 + b1_ref[...], 0.0)

    # Layer 2 Linear (with BN1 folded in).
    z2 = jnp.dot(z1.astype(w2_ref.dtype), w2_ref[...],
                 preferred_element_type=jnp.float32) + b2_ref[...]

    if apply_bn2_in_kernel:
        # BN2 scale has negative entries -> does not commute with max; apply per row.
        z2 = jnp.maximum(z2, 0.0) * sc2_ref[...] + sh2_ref[...]

    # Segmented max inside this tile (static small-B loop), then ONE dense
    # (b_pad, c_pad) maximum-accumulate into the resident, lane-dense output block.
    neg_inf = jnp.float32(-jnp.inf)
    bidx = bidx_ref[...]                                  # (tile, 1) int32; pad rows are -1
    rows = []
    for g in range(num_graphs):
        masked = jnp.where(bidx == g, z2, neg_inf)        # (tile, c_pad)
        rows.append(jnp.max(masked, axis=0, keepdims=True))
    for _ in range(num_graphs, b_pad):
        rows.append(jnp.full((1, z2.shape[1]), neg_inf, jnp.float32))
    tile_max = jnp.concatenate(rows, axis=0)              # (b_pad, c_pad)
    out_ref[...] = jnp.maximum(out_ref[...], tile_max[None])


def global_sa_module(x, pos, batch, params, num_graphs, *,
                     tile_n=1024, num_splits=2, matmul_dtype=jnp.float32):
    """Returns (x_pooled (B, C_out), pos_out (B, 3) zeros, batch_out (B,) arange).

    NOTE: expects concrete (non-traced) params — BN folding and the
    `scale2 >= 0` check happen host-side.
    """
    n, c_feat = x.shape
    c1 = params["w1"].shape[1]
    c2 = params["w2"].shape[1]
    c1p = _round_up(c1, 128)
    c2p = _round_up(c2, 128)
    b_pad = _round_up(max(num_graphs, 1), 8)

    # ---- host-side param prep: fold BN1 into Linear-2, BN2 into (scale, shift) ----
    scale1 = params["g1"] * jax.lax.rsqrt(params["v1"] + BN_EPS)          # (1, C1)
    shift1 = params["beta1"] - params["m1"] * scale1                      # (1, C1)
    w2_fold = scale1.reshape(c1, 1) * params["w2"]                        # (C1, C2)
    b2_fold = shift1 @ params["w2"] + params["b2"]                        # (1, C2)
    scale2 = params["g2"] * jax.lax.rsqrt(params["v2"] + BN_EPS)          # (1, C2)
    shift2 = params["beta2"] - params["m2"] * scale2                      # (1, C2)
    post_pool = bool(jnp.all(scale2 >= 0.0))  # ReLU/affine commute with max iff scale2 >= 0

    w1 = params["w1"]                                                     # (C_feat+3, C1)
    w1x = _pad2(w1[:c_feat, :], c_feat, c1p).astype(matmul_dtype)
    w1p = _pad2(w1[c_feat:, :], 3, c1p).astype(matmul_dtype)
    b1p = _pad2(params["b1"], 1, c1p).astype(jnp.float32)
    w2p = _pad2(w2_fold, c1p, c2p).astype(matmul_dtype)
    b2p = _pad2(b2_fold, 1, c2p).astype(jnp.float32)
    sc2p = _pad2(scale2, 1, c2p).astype(jnp.float32)
    sh2p = _pad2(shift2, 1, c2p).astype(jnp.float32)

    # ---- tiling: (num_splits parallel) x (tiles_per_split arbitrary) over N ----
    rows_per_split = (n + num_splits - 1) // num_splits
    tile = max(8, min(tile_n, _round_up(rows_per_split, 8)))
    tiles_per_split = (rows_per_split + tile - 1) // tile
    n_pad = num_splits * tiles_per_split * tile
    pad_rows = n_pad - n

    xf = jnp.pad(x.astype(matmul_dtype), ((0, pad_rows), (0, 0)))
    posf = jnp.pad(pos.astype(matmul_dtype), ((0, pad_rows), (0, 0)))
    batch2d = jnp.pad(batch.astype(jnp.int32), (0, pad_rows),
                      constant_values=-1).reshape(n_pad, 1)    # -1 never matches a graph id

    def stream_map(s, t):
        return (s * tiles_per_split + t, 0)

    def resident_map(s, t):
        return (0, 0)

    in_specs = [
        pl.BlockSpec((tile, c_feat), stream_map),     # x
        pl.BlockSpec((tile, 3), stream_map),          # pos
        pl.BlockSpec((tile, 1), stream_map),          # batch index
        pl.BlockSpec((c_feat, c1p), resident_map),    # w1x
        pl.BlockSpec((3, c1p), resident_map),         # w1p
        pl.BlockSpec((1, c1p), resident_map),         # b1
        pl.BlockSpec((c1p, c2p), resident_map),       # w2 (BN1-folded)
        pl.BlockSpec((1, c2p), resident_map),         # b2 (BN1-folded)
        pl.BlockSpec((1, c2p), resident_map),         # BN2 scale
        pl.BlockSpec((1, c2p), resident_map),         # BN2 shift
    ]
    out_specs = pl.BlockSpec((1, b_pad, c2p), lambda s, t: (s, 0, 0))

    itemsize = jnp.dtype(matmul_dtype).itemsize
    flops = 2 * n_pad * ((c_feat + 3) * c1p + c1p * c2p)
    bytes_accessed = (n_pad * (c_feat + 3) * itemsize          # streamed x/pos
                      + n_pad * 4                              # batch indices
                      + ((c_feat + 3) * c1p + c1p * c2p) * itemsize
                      + 4 * c2p * 4 + c1p * 4                  # biases / BN params
                      + num_splits * b_pad * c2p * 4)          # output

    kernel = functools.partial(global_sa_kernel,
                               num_graphs=num_graphs,
                               b_pad=b_pad,
                               apply_bn2_in_kernel=not post_pool)

    partial_max = pl.pallas_call(
        kernel,
        out_shape=jax.ShapeDtypeStruct((num_splits, b_pad, c2p), jnp.float32),
        grid_spec=pltpu.PrefetchScalarGridSpec(
            num_scalar_prefetch=0,
            grid=(num_splits, tiles_per_split),
            in_specs=in_specs,
            out_specs=out_specs,
        ),
        compiler_params=pltpu.CompilerParams(
            dimension_semantics=("parallel", "arbitrary"),
            vmem_limit_bytes=32 * 1024 * 1024,
        ),
        cost_estimate=pl.CostEstimate(flops=flops, transcendentals=0,
                                      bytes_accessed=bytes_accessed),
    )(xf, posf, batch2d, w1x, w1p, b1p, w2p, b2p, sc2p, sh2p)

    # Tiny (num_splits, B, C2) combine + optional post-pool ReLU/BN2 epilogue.
    pooled_raw = jnp.max(partial_max, axis=0)[:num_graphs, :c2]
    if post_pool:
        act = jnp.maximum(pooled_raw, 0.0) * scale2 + shift2
        pooled = jnp.where(jnp.isneginf(pooled_raw), pooled_raw, act)  # keep -inf for empty graphs
    else:
        pooled = pooled_raw

    pos_out = jnp.zeros((num_graphs, 3), dtype=pos.dtype)
    batch_out = jnp.arange(num_graphs, dtype=batch.dtype)
    return pooled, pos_out, batch_out


def reference(x, pos, batch, params, num_graphs):
    h = jnp.concatenate([x, pos], axis=1)
    for i in (1, 2):
        w, b = params[f"w{i}"], params[f"b{i}"]
        g, be = params[f"g{i}"], params[f"beta{i}"]
        m, v = params[f"m{i}"], params[f"v{i}"]
        h = jnp.maximum(h @ w + b, 0.0)
        h = (h - m) * g / jnp.sqrt(v + BN_EPS) + be
    out = jnp.full((num_graphs, h.shape[1]), -jnp.inf, h.dtype)
    out = out.at[batch].max(h)
    return out


if __name__ == "__main__":
    # Small synthetic sizes: N=64 points, 2 graphs, C=4 features, MLP [4+3, 32, 64]
    N, B = 64, 2
    C_in_feat, C1, C2 = 4, 32, 64

    key = jax.random.PRNGKey(0)
    ks = jax.random.split(key, 12)
    x = jax.random.normal(ks[0], (N, C_in_feat), dtype=jnp.float32)
    pos = jax.random.normal(ks[1], (N, 3), dtype=jnp.float32)
    batch = jnp.concatenate([jnp.zeros(N // 2, jnp.int32), jnp.ones(N - N // 2, jnp.int32)])

    # Deterministic parameters (Linear weights stored transposed: (C_in, C_out))
    params = {
        "w1": 0.1 * jax.random.normal(ks[2], (C_in_feat + 3, C1), dtype=jnp.float32),
        "b1": 0.01 * jax.random.normal(ks[3], (1, C1), dtype=jnp.float32),
        "g1": 1.0 + 0.05 * jax.random.normal(ks[4], (1, C1), dtype=jnp.float32),
        "beta1": 0.02 * jax.random.normal(ks[5], (1, C1), dtype=jnp.float32),
        "m1": 0.1 * jax.random.normal(ks[6], (1, C1), dtype=jnp.float32),
        "v1": jnp.ones((1, C1), dtype=jnp.float32) * 0.9,
        "w2": 0.1 * jax.random.normal(ks[7], (C1, C2), dtype=jnp.float32),
        "b2": 0.01 * jax.random.normal(ks[8], (1, C2), dtype=jnp.float32),
        "g2": 1.0 + 0.05 * jax.random.normal(ks[9], (1, C2), dtype=jnp.float32),
        "beta2": jnp.zeros((1, C2), dtype=jnp.float32),
        "m2": jnp.zeros((1, C2), dtype=jnp.float32),
        "v2": jnp.ones((1, C2), dtype=jnp.float32),
    }

    # --- f32 run (exact parity with the per-layer reference) ---
    out_x, out_pos, out_batch = global_sa_module(x, pos, batch, params, num_graphs=B)
    jax.block_until_ready((out_x, out_pos, out_batch))
    ref = reference(x, pos, batch, params, B)
    assert out_x.shape == (B, C2) and out_pos.shape == (B, 3) and out_batch.shape == (B,)
    assert jnp.allclose(out_x, ref, atol=1e-4, rtol=1e-4)
    assert jnp.all(out_pos == 0.0) and jnp.all(out_batch == jnp.arange(B))

    # --- non-divisible N (exercises row padding / sentinel batch ids) ---
    N2 = 50
    x2, pos2, batch2 = x[:N2], pos[:N2], batch[:N2]
    out_x2, _, _ = global_sa_module(x2, pos2, batch2, params, num_graphs=B)
    jax.block_until_ready(out_x2)
    ref2 = reference(x2, pos2, batch2, params, B)
    assert jnp.allclose(out_x2, ref2, atol=1e-4, rtol=1e-4)

    # --- bf16 matmul-input variant (v6e/v7x HBM-traffic optimization), loose check ---
    out_bf16, _, _ = global_sa_module(x, pos, batch, params, num_graphs=B,
                                      matmul_dtype=jnp.bfloat16)
    jax.block_until_ready(out_bf16)
    assert out_bf16.shape == (B, C2)
    assert jnp.allclose(out_bf16, ref, atol=1e-1, rtol=1e-1)

    print("KERNEL_OK")
</pallas_src>

<mosaic_0001>
module attributes {stable_mosaic.version = 11 : i64} {
  func.func @global_sa_kernel(%arg0: i32, %arg1: i32, %arg2: memref<32x4xf32, #tpu.memory_space<vmem>>, %arg3: memref<32x3xf32, #tpu.memory_space<vmem>>, %arg4: memref<32x1xi32, #tpu.memory_space<vmem>>, %arg5: memref<4x128xf32, #tpu.memory_space<vmem>>, %arg6: memref<3x128xf32, #tpu.memory_space<vmem>>, %arg7: memref<1x128xf32, #tpu.memory_space<vmem>>, %arg8: memref<128x128xf32, #tpu.memory_space<vmem>>, %arg9: memref<1x128xf32, #tpu.memory_space<vmem>>, %arg10: memref<1x128xf32, #tpu.memory_space<vmem>>, %arg11: memref<1x128xf32, #tpu.memory_space<vmem>>, %arg12: memref<1x8x128xf32, #tpu.memory_space<vmem>>) attributes {dimension_semantics = [#tpu.dimension_semantics<parallel>, #tpu.dimension_semantics<arbitrary>], iteration_bounds = array<i64: 2, 1>, scalar_prefetch = 0 : i64, scratch_operands = 0 : i64, tpu.core_type = #tpu.core_type<tc>, window_params = [{transform_indices = @transform_0, window_bounds = array<i64: 32, 4>}, {transform_indices = @transform_1, window_bounds = array<i64: 32, 3>}, {transform_indices = @transform_2, window_bounds = array<i64: 32, 1>}, {pipeline_mode = #tpu.pipeline_mode<synchronous>, transform_indices = @transform_3, window_bounds = array<i64: 4, 128>}, {pipeline_mode = #tpu.pipeline_mode<synchronous>, transform_indices = @transform_4, window_bounds = array<i64: 3, 128>}, {pipeline_mode = #tpu.pipeline_mode<synchronous>, transform_indices = @transform_5, window_bounds = array<i64: 1, 128>}, {pipeline_mode = #tpu.pipeline_mode<synchronous>, transform_indices = @transform_6, window_bounds = array<i64: 128, 128>}, {pipeline_mode = #tpu.pipeline_mode<synchronous>, transform_indices = @transform_7, window_bounds = array<i64: 1, 128>}, {pipeline_mode = #tpu.pipeline_mode<synchronous>, transform_indices = @transform_8, window_bounds = array<i64: 1, 128>}, {pipeline_mode = #tpu.pipeline_mode<synchronous>, transform_indices = @transform_9, window_bounds = array<i64: 1, 128>}, {transform_indices = @transform_10, window_bounds = array<i64: 1, 8, 128>}]} {
    %c0_i32 = arith.constant 0 : i32
    %0 = arith.cmpi eq, %arg1, %c0_i32 : i32
    %1 = arith.extui %0 : i1 to i32
    %c0_i32_0 = arith.constant 0 : i32
    %2 = arith.cmpi ne, %1, %c0_i32_0 : i32
    scf.if %2 {
      %cst_36 = arith.constant 0xFF800000 : f32
      %48 = vector.broadcast %cst_36 : f32 to vector<1x8x128xf32>
      %c0_37 = arith.constant 0 : index
      %c0_38 = arith.constant 0 : index
      %c0_39 = arith.constant 0 : index
      %49 = vector.load %arg12[%c0_37, %c0_38, %c0_39] : memref<1x8x128xf32, #tpu.memory_space<vmem>>, vector<1x8x128xf32>
      tpu.vector_store %arg12[%c0_37, %c0_38, %c0_39], %48 {strides = array<i32>} : memref<1x8x128xf32, #tpu.memory_space<vmem>>, vector<1x8x128xf32>,
    } else {
    }
    %c0 = arith.constant 0 : index
    %c0_1 = arith.constant 0 : index
    %3 = vector.load %arg2[%c0, %c0_1] : memref<32x4xf32, #tpu.memory_space<vmem>>, vector<32x4xf32>
    %c0_2 = arith.constant 0 : index
    %c0_3 = arith.constant 0 : index
    %4 = vector.load %arg5[%c0_2, %c0_3] : memref<4x128xf32, #tpu.memory_space<vmem>>, vector<4x128xf32>
    %cst = arith.constant dense<0.000000e+00> : vector<32x128xf32>
    %5 = tpu.matmul %3, %4, %cst {dimension_numbers = #tpu.dot_dimension_numbers<[1], [0], [0], [1], [0, 0, 1, 1], [], []>} : vector<32x4xf32>, vector<4x128xf32>, vector<32x128xf32> -> vector<32x128xf32>
    %c0_4 = arith.constant 0 : index
    %c0_5 = arith.constant 0 : index
    %6 = vector.load %arg3[%c0_4, %c0_5] : memref<32x3xf32, #tpu.memory_space<vmem>>, vector<32x3xf32>
    %c0_6 = arith.constant 0 : index
    %c0_7 = arith.constant 0 : index
    %7 = vector.load %arg6[%c0_6, %c0_7] : memref<3x128xf32, #tpu.memory_space<vmem>>, vector<3x128xf32>
    %cst_8 = arith.constant dense<0.000000e+00> : vector<32x128xf32>
    %8 = tpu.matmul %6, %7, %cst_8 {dimension_numbers = #tpu.dot_dimension_numbers<[1], [0], [0], [1], [0, 0, 1, 1], [], []>} : vector<32x3xf32>, vector<3x128xf32>, vector<32x128xf32> -> vector<32x128xf32>
    %9 = arith.addf %5, %8 : vector<32x128xf32>
    %c0_9 = arith.constant 0 : index
    %c0_10 = arith.constant 0 : index
    %10 = vector.load %arg7[%c0_9, %c0_10] : memref<1x128xf32, #tpu.memory_space<vmem>>, vector<1x128xf32>
    %11 = vector.broadcast %10 : vector<1x128xf32> to vector<32x128xf32>
    %12 = arith.addf %9, %11 : vector<32x128xf32>
    %cst_11 = arith.constant 0.000000e+00 : f32
    %13 = vector.broadcast %cst_11 : f32 to vector<32x128xf32>
    %14 = arith.maximumf %12, %13 : vector<32x128xf32>
    %c0_12 = arith.constant 0 : index
    %c0_13 = arith.constant 0 : index
    %15 = vector.load %arg8[%c0_12, %c0_13] : memref<128x128xf32, #tpu.memory_space<vmem>>, vector<128x128xf32>
    %cst_14 = arith.constant dense<0.000000e+00> : vector<32x128xf32>
    %16 = tpu.matmul %14, %15, %cst_14 {dimension_numbers = #tpu.dot_dimension_numbers<[1], [0], [0], [1], [0, 0, 1, 1], [], []>} : vector<32x128xf32>, vector<128x128xf32>, vector<32x128xf32> -> vector<32x128xf32>
    %c0_15 = arith.constant 0 : index
    %c0_16 = arith.constant 0 : index
    %17 = vector.load %arg9[%c0_15, %c0_16] : memref<1x128xf32, #tpu.memory_space<vmem>>, vector<1x128xf32>
    %18 = vector.broadcast %17 : vector<1x128xf32> to vector<32x128xf32>
    %19 = arith.addf %16, %18 : vector<32x128xf32>
    %c0_17 = arith.constant 0 : index
    %c0_18 = arith.constant 0 : index
    %20 = vector.load %arg4[%c0_17, %c0_18] : memref<32x1xi32, #tpu.memory_space<vmem>>, vector<32x1xi32>
    %c0_i32_19 = arith.constant 0 : i32
    %21 = vector.broadcast %c0_i32_19 : i32 to vector<32x1xi32>
    %22 = arith.cmpi eq, %20, %21 : vector<32x1xi32>
    %cst_20 = arith.constant 0xFF800000 : f32
    %23 = vector.shape_cast %22 : vector<32x1xi1> to vector<32x1xi1>
    %24 = vector.broadcast %23 : vector<32x1xi1> to vector<32x128xi1>
    %25 = vector.broadcast %cst_20 : f32 to vector<32x128xf32>
    %26 = arith.select %24, %19, %25 : vector<32x128xi1>, vector<32x128xf32>
    %cst_21 = arith.constant dense<0xFF800000> : vector<128xf32>
    %27 = vector.multi_reduction <maximumf>, %26, %cst_21 [0] : vector<32x128xf32> to vector<128xf32>
    %28 = vector.shape_cast %27 : vector<128xf32> to vector<1x128xf32>
    %c1_i32 = arith.constant 1 : i32
    %29 = vector.broadcast %c1_i32 : i32 to vector<32x1xi32>
    %30 = arith.cmpi eq, %20, %29 : vector<32x1xi32>
    %cst_22 = arith.constant 0xFF800000 : f32
    %31 = vector.shape_cast %30 : vector<32x1xi1> to vector<32x1xi1>
    %32 = vector.broadcast %31 : vector<32x1xi1> to vector<32x128xi1>
    %33 = vector.broadcast %cst_22 : f32 to vector<32x128xf32>
    %34 = arith.select %32, %19, %33 : vector<32x128xi1>, vector<32x128xf32>
    %cst_23 = arith.constant dense<0xFF800000> : vector<128xf32>
    %35 = vector.multi_reduction <maximumf>, %34, %cst_23 [0] : vector<32x128xf32> to vector<128xf32>
    %36 = vector.shape_cast %35 : vector<128xf32> to vector<1x128xf32>
    %cst_24 = arith.constant 0xFF800000 : f32
    %37 = vector.broadcast %cst_24 : f32 to vector<1x128xf32>
    %cst_25 = arith.constant 0xFF800000 : f32
    %38 = vector.broadcast %cst_25 : f32 to vector<1x128xf32>
    %cst_26 = arith.constant 0xFF800000 : f32
    %39 = vector.broadcast %cst_26 : f32 to vector<1x128xf32>
    %cst_27 = arith.constant 0xFF800000 : f32
    %40 = vector.broadcast %cst_27 : f32 to vector<1x128xf32>
    %cst_28 = arith.constant 0xFF800000 : f32
    %41 = vector.broadcast %cst_28 : f32 to vector<1x128xf32>
    %cst_29 = arith.constant 0xFF800000 : f32
    %42 = vector.broadcast %cst_29 : f32 to vector<1x128xf32>
    %43 = tpu.concatenate %28, %36, %37, %38, %39, %40, %41, %42 in 0 : vector<1x128xf32>, vector<1x128xf32>, vector<1x128xf32>, vector<1x128xf32>, vector<1x128xf32>, vector<1x128xf32>, vector<1x128xf32>, vector<1x128xf32> -> vector<8x128xf32>
    %c0_30 = arith.constant 0 : index
    %c0_31 = arith.constant 0 : index
    %c0_32 = arith.constant 0 : index
    %44 = vector.load %arg12[%c0_30, %c0_31, %c0_32] : memref<1x8x128xf32, #tpu.memory_space<vmem>>, vector<1x8x128xf32>
    %45 = vector.shape_cast %43 : vector<8x128xf32> to vector<1x8x128xf32>
    %46 = arith.maximumf %44, %45 : vector<1x8x128xf32>
    %c0_33 = arith.constant 0 : index
    %c0_34 = arith.constant 0 : index
    %c0_35 = arith.constant 0 : index
    %47 = vector.load %arg12[%c0_33, %c0_34, %c0_35] : memref<1x8x128xf32, #tpu.memory_space<vmem>>, vector<1x8x128xf32>
    tpu.vector_store %arg12[%c0_33, %c0_34, %c0_35], %46 {strides = array<i32>} : memref<1x8x128xf32, #tpu.memory_space<vmem>>, vector<1x8x128xf32>,
    return
  }
  func.func @transform_0(%arg0: i32, %arg1: i32) -> (i32, i32) {
    %c1_i32 = arith.constant 1 : i32
    %0 = arith.muli %arg0, %c1_i32 : i32
    %1 = arith.addi %0, %arg1 : i32
    %c0_i32 = arith.constant 0 : i32
    %c0_i32_0 = arith.constant 0 : i32
    return %1, %c0_i32 : i32, i32
  }
  func.func @transform_1(%arg0: i32, %arg1: i32) -> (i32, i32) {
    %c1_i32 = arith.constant 1 : i32
    %0 = arith.muli %arg0, %c1_i32 : i32
    %1 = arith.addi %0, %arg1 : i32
    %c0_i32 = arith.constant 0 : i32
    %c0_i32_0 = arith.constant 0 : i32
    return %1, %c0_i32 : i32, i32
  }
  func.func @transform_2(%arg0: i32, %arg1: i32) -> (i32, i32) {
    %c1_i32 = arith.constant 1 : i32
    %0 = arith.muli %arg0, %c1_i32 : i32
    %1 = arith.addi %0, %arg1 : i32
    %c0_i32 = arith.constant 0 : i32
    %c0_i32_0 = arith.constant 0 : i32
    return %1, %c0_i32 : i32, i32
  }
  func.func @transform_3(%arg0: i32, %arg1: i32) -> (i32, i32) {
    %c0_i32 = arith.constant 0 : i32
    %c0_i32_0 = arith.constant 0 : i32
    %c0_i32_1 = arith.constant 0 : i32
    return %c0_i32, %c0_i32_0 : i32, i32
  }
  func.func @transform_4(%arg0: i32, %arg1: i32) -> (i32, i32) {
    %c0_i32 = arith.constant 0 : i32
    %c0_i32_0 = arith.constant 0 : i32
    %c0_i32_1 = arith.constant 0 : i32
    return %c0_i32, %c0_i32_0 : i32, i32
  }
  func.func @transform_5(%arg0: i32, %arg1: i32) -> (i32, i32) {
    %c0_i32 = arith.constant 0 : i32
    %c0_i32_0 = arith.constant 0 : i32
    %c0_i32_1 = arith.constant 0 : i32
    return %c0_i32, %c0_i32_0 : i32, i32
  }
  func.func @transform_6(%arg0: i32, %arg1: i32) -> (i32, i32) {
    %c0_i32 = arith.constant 0 : i32
    %c0_i32_0 = arith.constant 0 : i32
    %c0_i32_1 = arith.constant 0 : i32
    return %c0_i32, %c0_i32_0 : i32, i32
  }
  func.func @transform_7(%arg0: i32, %arg1: i32) -> (i32, i32) {
    %c0_i32 = arith.constant 0 : i32
    %c0_i32_0 = arith.constant 0 : i32
    %c0_i32_1 = arith.constant 0 : i32
    return %c0_i32, %c0_i32_0 : i32, i32
  }
  func.func @transform_8(%arg0: i32, %arg1: i32) -> (i32, i32) {
    %c0_i32 = arith.constant 0 : i32
    %c0_i32_0 = arith.constant 0 : i32
    %c0_i32_1 = arith.constant 0 : i32
    return %c0_i32, %c0_i32_0 : i32, i32
  }
  func.func @transform_9(%arg0: i32, %arg1: i32) -> (i32, i32) {
    %c0_i32 = arith.constant 0 : i32
    %c0_i32_0 = arith.constant 0 : i32
    %c0_i32_1 = arith.constant 0 : i32
    return %c0_i32, %c0_i32_0 : i32, i32
  }
  func.func @transform_10(%arg0: i32, %arg1: i32) -> (i32, i32, i32) {
    %c0_i32 = arith.constant 0 : i32
    %c0_i32_0 = arith.constant 0 : i32
    %c0_i32_1 = arith.constant 0 : i32
    return %arg0, %c0_i32, %c0_i32_0 : i32, i32, i32
  }
}

</mosaic_0001>

<llo_original>
// kernel: tpu_custom_call.1
$region0: #{tpu_custom_call.1}
  #allocation0 [shape = 'u32[]', space=smem, size = 0x4, offset = 0x4, fixed_abs, tag = 'smem constant byte address 0x4 - core index']
  #allocation1 [shape = 'u32[144,128]{1,0:T(1,128)}', space=vmem, size = 0x12000, scoped, tag = 'internal scratch']
  %s0 = inlined_call_operand.vmem [shape: f32[64,4], index: 0, kind: input, shape index: {}]
  %s1 = inlined_call_operand.vmem [shape: f32[64,3], index: 1, kind: input, shape index: {}]
  %s2 = inlined_call_operand.vmem [shape: s32[64,1], index: 2, kind: input, shape index: {}]
  %s3 = inlined_call_operand.vmem [shape: f32[4,128], index: 3, kind: input, shape index: {}]
  %s4 = inlined_call_operand.vmem [shape: f32[3,128], index: 4, kind: input, shape index: {}]
  %s5 = inlined_call_operand.vmem [shape: f32[1,128], index: 5, kind: input, shape index: {}]
  %s6 = inlined_call_operand.vmem [shape: f32[128,128], index: 6, kind: input, shape index: {}]
  %s7 = inlined_call_operand.vmem [shape: f32[1,128], index: 7, kind: input, shape index: {}]
  %s8 = inlined_call_operand.vmem [shape: f32[1,128], index: 8, kind: input, shape index: {}]
  %s9 = inlined_call_operand.vmem [shape: f32[1,128], index: 9, kind: input, shape index: {}]
  %s10 = inlined_call_operand.hbm [shape: f32[2,8,128], index: 10, kind: output, shape index: {}]
  %s11 = sld [smem:[#allocation0]]
  $region77: #{tpu_custom_call.1} parent=0
    _
  %s13 = ssub.s32 1, %s11
  %s14 = scalar_select 0, %s13, %s11
  $region1: #{tpu_custom_call.1} parent=0
    #allocation2 [shape = 'u8[8192]{0}', space=vmem, size = 0x2000, scoped, tag = 'output window, operand 0']
    #allocation3 [shape = 's32[2]{0}', space=sflag, size = 0x8, scoped, tag = 'scoped memory for tpu_custom_call.1']
    %15 = vsyncpa [#allocation3], 0
    %s16 = scalar_lea.sflag [#allocation3], 1
    %17 = vsyncpa %s16, 0
    loop: start=0, step=1, limit=4
    $region2: #{tpu_custom_call.1} parent=1 // loop_pre_header
      _
    $region3: #{tpu_custom_call.1} parent=1 // loop_header
      %s19 = sphi 0, %s23
      %p20 = scmp.ge.s32.totalorder %s19, 4
      %s26 = sphi 0, %s38
      %s27 = sphi 0, %s34
      %s28 = sphi 0, %s26
      %s29 = sphi 0, %s27
      %s30 = sphi 0, %s28
      %s31 = sphi 0, %s29
      %s43 = sphi 0, %s45
      %s46 = sphi 0, %s43
      %s47 = sphi 0, %s46
      %s63 = sphi 0, %s47
      %s71 = sphi 0, %s73
      %s74 = sphi 0, %s71
      %s75 = sphi 0, %s74
      %s91 = sphi 0, %s75
      %s99 = sphi 0, %s101
      %s102 = sphi 0, %s99
      %s103 = sphi 0, %s102
      %s119 = sphi 0, %s103
      %s123 = sphi 0, %s123
      %s125 = sphi 0, %s123
      %s126 = sphi 0, %s125
      %s140 = sphi 0, %s126
      %s144 = sphi 0, %s144
      %s146 = sphi 0, %s144
      %s147 = sphi 0, %s146
      %s161 = sphi 0, %s147
      %s165 = sphi 0, %s165
      %s167 = sphi 0, %s165
      %s168 = sphi 0, %s167
      %s182 = sphi 0, %s168
      %s186 = sphi 0, %s186
      %s188 = sphi 0, %s186
      %s189 = sphi 0, %s188
      %s203 = sphi 0, %s189
      %s207 = sphi 0, %s207
      %s209 = sphi 0, %s207
      %s210 = sphi 0, %s209
      %s224 = sphi 0, %s210
      %s228 = sphi 0, %s228
      %s230 = sphi 0, %s228
      %s231 = sphi 0, %s230
      %s245 = sphi 0, %s231
      %s249 = sphi 0, %s249
      %s251 = sphi 0, %s249
      %s252 = sphi 0, %s251
      %s266 = sphi 0, %s252
      %s272 = sphi 0, %s274
      %s275 = sphi 0, %s272
      %s276 = sphi 0, %s275
      %s292 = sphi 0, %s276
    $region4: #{tpu_custom_call.1} parent=1 // loop_header_branch
      %22 = sbr.rel (%p20) target = $region8
    $region5: #{tpu_custom_call.1} parent=1 // loop_body
      %s24 = ssub.s32 %s19, 1
      %s25 = ssub.s32 %s19, 2
      %s32 = sadd.s32 1, %s27
      %p33 = scmp.ge.s32.totalorder %s32, 1
      %s34 = scalar_select %p33, 0, %s32
      %s35 = sadd.s32 1, %s26
      %s36 = scalar_select %p33, %s35, %s26
      %p37 = scmp.ge.s32.totalorder %s36, 2
      %s38 = scalar_select %p37, 0, %s36
      %s39 = sadd.s32 %s26, %s27
      %s40 = sadd.s32 %s38, %s34
      %s41 = ssub.s32 %s39, %s40
      %p42 = scmp.eq.s32.totalorder %s41, 0
      %s44 = sadd.s32 %s43, 1
      %s45 = scalar_select %p42, %s43, %s44
      %p48 = pneg %p42
      %p49 = scmp.eq.s32.totalorder %s19, 1
      %p50 = por %p48, %p49
      %p51 = scmp.ne.s32.totalorder %s43, %s46
      %p52 = scmp.eq.s32.totalorder %s19, 0
      %p53 = por %p51, %p52
      %p54 = scmp.ne.s32.totalorder %s43, %s46
      %p55 = scmp.eq.s32.totalorder %s24, 1
      %p56 = por %p54, %p55
      %p57 = scmp.ne.s32.totalorder %s46, %s47
      %p58 = scmp.eq.s32.totalorder %s24, 0
      %p59 = por %p57, %p58
      %p60 = scmp.ne.s32.totalorder %s46, %s47
      %p61 = scmp.eq.s32.totalorder %s25, 1
      %p62 = por %p60, %p61
      %p64 = scmp.ne.s32.totalorder %s47, %s63
      %p65 = scmp.eq.s32.totalorder %s25, 0
      %p66 = por %p64, %p65
      %s67 = sadd.s32 %s26, %s27
      %s68 = sadd.s32 %s38, %s34
      %s69 = ssub.s32 %s67, %s68
      %p70 = scmp.eq.s32.totalorder %s69, 0
      %s72 = sadd.s32 %s71, 1
      %s73 = scalar_select %p70, %s71, %s72
      %p76 = pneg %p70
      %p77 = scmp.eq.s32.totalorder %s19, 1
      %p78 = por %p76, %p77
      %p79 = scmp.ne.s32.totalorder %s71, %s74
      %p80 = scmp.eq.s32.totalorder %s19, 0
      %p81 = por %p79, %p80
      %p82 = scmp.ne.s32.totalorder %s71, %s74
      %p83 = scmp.eq.s32.totalorder %s24, 1
      %p84 = por %p82, %p83
      %p85 = scmp.ne.s32.totalorder %s74, %s75
      %p86 = scmp.eq.s32.totalorder %s24, 0
      %p87 = por %p85, %p86
      %p88 = scmp.ne.s32.totalorder %s74, %s75
      %p89 = scmp.eq.s32.totalorder %s25, 1
      %p90 = por %p88, %p89
      %p92 = scmp.ne.s32.totalorder %s75, %s91
      %p93 = scmp.eq.s32.totalorder %s25, 0
      %p94 = por %p92, %p93
      %s95 = sadd.s32 %s26, %s27
      %s96 = sadd.s32 %s38, %s34
      %s97 = ssub.s32 %s95, %s96
      %p98 = scmp.eq.s32.totalorder %s97, 0
      %s100 = sadd.s32 %s99, 1
      %s101 = scalar_select %p98, %s99, %s100
      %p104 = pneg %p98
      %p105 = scmp.eq.s32.totalorder %s19, 1
      %p106 = por %p104, %p105
      %p107 = scmp.ne.s32.totalorder %s99, %s102
      %p108 = scmp.eq.s32.totalorder %s19, 0
      %p109 = por %p107, %p108
      %p110 = scmp.ne.s32.totalorder %s99, %s102
      %p111 = scmp.eq.s32.totalorder %s24, 1
      %p112 = por %p110, %p111
      %p113 = scmp.ne.s32.totalorder %s102, %s103
      %p114 = scmp.eq.s32.totalorder %s24, 0
      %p115 = por %p113, %p114
      %p116 = scmp.ne.s32.totalorder %s102, %s103
      %p117 = scmp.eq.s32.totalorder %s25, 1
      %p118 = por %p116, %p117
      %p120 = scmp.ne.s32.totalorder %s103, %s119
      %p121 = scmp.eq.s32.totalorder %s25, 0
      %p122 = por %p120, %p121
      %s124 = sadd.s32 %s123, 1
      %p127 = scmp.eq.s32.totalorder %s19, 1
      %p128 = scmp.ne.s32.totalorder %s123, %s125
      %p129 = scmp.eq.s32.totalorder %s19, 0
      %p130 = por %p128, %p129
      %p131 = scmp.ne.s32.totalorder %s123, %s125
      %p132 = scmp.eq.s32.totalorder %s24, 1
      %p133 = por %p131, %p132
      %p134 = scmp.ne.s32.totalorder %s125, %s126
      %p135 = scmp.eq.s32.totalorder %s24, 0
      %p136 = por %p134, %p135
      %p137 = scmp.ne.s32.totalorder %s125, %s126
      %p138 = scmp.eq.s32.totalorder %s25, 1
      %p139 = por %p137, %p138
      %p141 = scmp.ne.s32.totalorder %s126, %s140
      %p142 = scmp.eq.s32.totalorder %s25, 0
      %p143 = por %p141, %p142
      %s145 = sadd.s32 %s144, 1
      %p148 = scmp.eq.s32.totalorder %s19, 1
      %p149 = scmp.ne.s32.totalorder %s144, %s146
      %p150 = scmp.eq.s32.totalorder %s19, 0
      %p151 = por %p149, %p150
      %p152 = scmp.ne.s32.totalorder %s144, %s146
      %p153 = scmp.eq.s32.totalorder %s24, 1
      %p154 = por %p152, %p153
      %p155 = scmp.ne.s32.totalorder %s146, %s147
      %p156 = scmp.eq.s32.totalorder %s24, 0
      %p157 = por %p155, %p156
      %p158 = scmp.ne.s32.totalorder %s146, %s147
      %p159 = scmp.eq.s32.totalorder %s25, 1
      %p160 = por %p158, %p159
      %p162 = scmp.ne.s32.totalorder %s147, %s161
      %p163 = scmp.eq.s32.totalorder %s25, 0
      %p164 = por %p162, %p163
      %s166 = sadd.s32 %s165, 1
      %p169 = scmp.eq.s32.totalorder %s19, 1
      %p170 = scmp.ne.s32.totalorder %s165, %s167
      %p171 = scmp.eq.s32.totalorder %s19, 0
      %p172 = por %p170, %p171
      %p173 = scmp.ne.s32.totalorder %s165, %s167
      %p174 = scmp.eq.s32.totalorder %s24, 1
      %p175 = por %p173, %p174
      %p176 = scmp.ne.s32.totalorder %s167, %s168
      %p177 = scmp.eq.s32.totalorder %s24, 0
      %p178 = por %p176, %p177
      %p179 = scmp.ne.s32.totalorder %s167, %s168
      %p180 = scmp.eq.s32.totalorder %s25, 1
      %p181 = por %p179, %p180
      %p183 = scmp.ne.s32.totalorder %s168, %s182
      %p184 = scmp.eq.s32.totalorder %s25, 0
      %p185 = por %p183, %p184
      %s187 = sadd.s32 %s186, 1
      %p190 = scmp.eq.s32.totalorder %s19, 1
      %p191 = scmp.ne.s32.totalorder %s186, %s188
      %p192 = scmp.eq.s32.totalorder %s19, 0
      %p193 = por %p191, %p192
      %p194 = scmp.ne.s32.totalorder %s186, %s188
      %p195 = scmp.eq.s32.totalorder %s24, 1
      %p196 = por %p194, %p195
      %p197 = scmp.ne.s32.totalorder %s188, %s189
      %p198 = scmp.eq.s32.totalorder %s24, 0
      %p199 = por %p197, %p198
      %p200 = scmp.ne.s32.totalorder %s188, %s189
      %p201 = scmp.eq.s32.totalorder %s25, 1
      %p202 = por %p200, %p201
      %p204 = scmp.ne.s32.totalorder %s189, %s203
      %p205 = scmp.eq.s32.totalorder %s25, 0
      %p206 = por %p204, %p205
      %s208 = sadd.s32 %s207, 1
      %p211 = scmp.eq.s32.totalorder %s19, 1
      %p212 = scmp.ne.s32.totalorder %s207, %s209
      %p213 = scmp.eq.s32.totalorder %s19, 0
      %p214 = por %p212, %p213
      %p215 = scmp.ne.s32.totalorder %s207, %s209
      %p216 = scmp.eq.s32.totalorder %s24, 1
      %p217 = por %p215, %p216
      %p218 = scmp.ne.s32.totalorder %s209, %s210
      %p219 = scmp.eq.s32.totalorder %s24, 0
      %p220 = por %p218, %p219
      %p221 = scmp.ne.s32.totalorder %s209, %s210
      %p222 = scmp.eq.s32.totalorder %s25, 1
      %p223 = por %p221, %p222
      %p225 = scmp.ne.s32.totalorder %s210, %s224
      %p226 = scmp.eq.s32.totalorder %s25, 0
      %p227 = por %p225, %p226
      %s229 = sadd.s32 %s228, 1
      %p232 = scmp.eq.s32.totalorder %s19, 1
      %p233 = scmp.ne.s32.totalorder %s228, %s230
      %p234 = scmp.eq.s32.totalorder %s19, 0
      %p235 = por %p233, %p234
      %p236 = scmp.ne.s32.totalorder %s228, %s230
      %p237 = scmp.eq.s32.totalorder %s24, 1
      %p238 = por %p236, %p237
      %p239 = scmp.ne.s32.totalorder %s230, %s231
      %p240 = scmp.eq.s32.totalorder %s24, 0
      %p241 = por %p239, %p240
      %p242 = scmp.ne.s32.totalorder %s230, %s231
      %p243 = scmp.eq.s32.totalorder %s25, 1
      %p244 = por %p242, %p243
      %p246 = scmp.ne.s32.totalorder %s231, %s245
      %p247 = scmp.eq.s32.totalorder %s25, 0
      %p248 = por %p246, %p247
      %s250 = sadd.s32 %s249, 1
      %p253 = scmp.eq.s32.totalorder %s19, 1
      %p254 = scmp.ne.s32.totalorder %s249, %s251
      %p255 = scmp.eq.s32.totalorder %s19, 0
      %p256 = por %p254, %p255
      %p257 = scmp.ne.s32.totalorder %s249, %s251
      %p258 = scmp.eq.s32.totalorder %s24, 1
      %p259 = por %p257, %p258
      %p260 = scmp.ne.s32.totalorder %s251, %s252
      %p261 = scmp.eq.s32.totalorder %s24, 0
      %p262 = por %p260, %p261
      %p263 = scmp.ne.s32.totalorder %s251, %s252
      %p264 = scmp.eq.s32.totalorder %s25, 1
      %p265 = por %p263, %p264
      %p267 = scmp.ne.s32.totalorder %s252, %s266
      %p268 = scmp.eq.s32.totalorder %s25, 0
      %p269 = por %p267, %p268
      %s270 = ssub.s32 %s26, %s38
      %p271 = scmp.eq.s32.totalorder %s270, 0
      %s273 = sadd.s32 %s272, 1
      %s274 = scalar_select %p271, %s272, %s273
      %p277 = pneg %p271
      %p278 = scmp.eq.s32.totalorder %s19, 1
      %p279 = por %p277, %p278
      %p280 = scmp.ne.s32.totalorder %s272, %s275
      %p281 = scmp.eq.s32.totalorder %s19, 0
      %p282 = por %p280, %p281
      %p283 = scmp.ne.s32.totalorder %s272, %s275
      %p284 = scmp.eq.s32.totalorder %s24, 1
      %p285 = por %p283, %p284
      %p286 = scmp.ne.s32.totalorder %s275, %s276
      %p287 = scmp.eq.s32.totalorder %s24, 0
      %p288 = por %p286, %p287
      %p289 = scmp.ne.s32.totalorder %s275, %s276
      %p290 = scmp.eq.s32.totalorder %s25, 1
      %p291 = por %p289, %p290
      %p293 = scmp.ne.s32.totalorder %s276, %s292
      %p294 = scmp.eq.s32.totalorder %s25, 0
      %p295 = por %p293, %p294
      %p296 = scmp.le.s32.totalorder 1, %s19
      %p297 = scmp.lt.s32.totalorder %s19, 3
      %p298 = pnand %p296, %p297
      %p299 = pneg %p298
      // Predicated region
      $region9: #{tpu_custom_call.1} parent=5 // pred_check
        _
      $region10: #{tpu_custom_call.1} parent=5 // pred_check_branch
        %301 = sbr.rel (%p298) target = $region12
      $region11: #{tpu_custom_call.1} parent=5 // pred_region
        %s302 = ssub.s32 %s19, 1
        // Predicated region
        $region13: #{tpu_custom_call.1} parent=11 // pred_check
          %p303 = pneg %p136
        $region14: #{tpu_custom_call.1} parent=11 // pred_check_branch
          %305 = sbr.rel (%p303) target = $region16
        $region15: #{tpu_custom_call.1} parent=11 // pred_region
          _
        $region16: #{tpu_custom_call.1} parent=11 // pred_fallthru
          _
        // Predicated region
        $region17: #{tpu_custom_call.1} parent=11 // pred_check
          %p306 = pneg %p157
        $region18: #{tpu_custom_call.1} parent=11 // pred_check_branch
          %308 = sbr.rel (%p306) target = $region20
        $region19: #{tpu_custom_call.1} parent=11 // pred_region
          _
        $region20: #{tpu_custom_call.1} parent=11 // pred_fallthru
          _
        // Predicated region
        $region21: #{tpu_custom_call.1} parent=11 // pred_check
          %p309 = pneg %p178
        $region22: #{tpu_custom_call.1} parent=11 // pred_check_branch
          %311 = sbr.rel (%p309) target = $region24
        $region23: #{tpu_custom_call.1} parent=11 // pred_region
          _
        $region24: #{tpu_custom_call.1} parent=11 // pred_fallthru
          _
        // Predicated region
        $region25: #{tpu_custom_call.1} parent=11 // pred_check
          %p312 = pneg %p199
        $region26: #{tpu_custom_call.1} parent=11 // pred_check_branch
          %314 = sbr.rel (%p312) target = $region28
        $region27: #{tpu_custom_call.1} parent=11 // pred_region
          _
        $region28: #{tpu_custom_call.1} parent=11 // pred_fallthru
          _
        // Predicated region
        $region29: #{tpu_custom_call.1} parent=11 // pred_check
          %p315 = pneg %p220
        $region30: #{tpu_custom_call.1} parent=11 // pred_check_branch
          %317 = sbr.rel (%p315) target = $region32
        $region31: #{tpu_custom_call.1} parent=11 // pred_region
          _
        $region32: #{tpu_custom_call.1} parent=11 // pred_fallthru
          _
        // Predicated region
        $region33: #{tpu_custom_call.1} parent=11 // pred_check
          %p318 = pneg %p241
        $region34: #{tpu_custom_call.1} parent=11 // pred_check_branch
          %320 = sbr.rel (%p318) target = $region36
        $region35: #{tpu_custom_call.1} parent=11 // pred_region
          _
        $region36: #{tpu_custom_call.1} parent=11 // pred_fallthru
          _
        // Predicated region
        $region37: #{tpu_custom_call.1} parent=11 // pred_check
          %p321 = pneg %p262
        $region38: #{tpu_custom_call.1} parent=11 // pred_check_branch
          %323 = sbr.rel (%p321) target = $region40
        $region39: #{tpu_custom_call.1} parent=11 // pred_region
          _
        $region40: #{tpu_custom_call.1} parent=11 // pred_fallthru
          _
      $region12: #{tpu_custom_call.1} parent=5 // pred_fallthru
        _
      %p324 = scmp.lt.s32.totalorder %s19, 2
      // Predicated region
      $region41: #{tpu_custom_call.1} parent=5 // pred_check
        %p325 = pneg %p324
      $region42: #{tpu_custom_call.1} parent=5 // pred_check_branch
        %327 = sbr.rel (%p325) target = $region44
      $region43: #{tpu_custom_call.1} parent=5 // pred_region
        // Predicated region
        $region45: #{tpu_custom_call.1} parent=43 // pred_check
          %p328 = pneg %p53
        $region46: #{tpu_custom_call.1} parent=43 // pred_check_branch
          %330 = sbr.rel (%p328) target = $region48
        $region47: #{tpu_custom_call.1} parent=43 // pred_region
          %s331 = sadd.s32 %s26, %s27
          %s332 = smul.u32 4, %s331
          %p333 = scmp.lt.s32.totalorder %s332, 7
          %s334 = scalar_select %p333, %s332, 7
          %s335 = smul.addr %s334, 8
          %s336 = scalar_lea.vmem %s0, %s335
          %s337 = sadd.s32 %s26, %s27
          %s338 = smul.u32 4, %s337
        $region48: #{tpu_custom_call.1} parent=43 // pred_fallthru
          _
        // Predicated region
        $region49: #{tpu_custom_call.1} parent=43 // pred_check
          %p339 = pneg %p81
        $region50: #{tpu_custom_call.1} parent=43 // pred_check_branch
          %341 = sbr.rel (%p339) target = $region52
        $region51: #{tpu_custom_call.1} parent=43 // pred_region
          %s342 = sadd.s32 %s26, %s27
          %s343 = smul.u32 4, %s342
          %p344 = scmp.lt.s32.totalorder %s343, 7
          %s345 = scalar_select %p344, %s343, 7
          %s346 = smul.addr %s345, 8
          %s347 = scalar_lea.vmem %s1, %s346
          %s348 = sadd.s32 %s26, %s27
          %s349 = smul.u32 4, %s348
        $region52: #{tpu_custom_call.1} parent=43 // pred_fallthru
          _
        // Predicated region
        $region53: #{tpu_custom_call.1} parent=43 // pred_check
          %p350 = pneg %p109
        $region54: #{tpu_custom_call.1} parent=43 // pred_check_branch
          %352 = sbr.rel (%p350) target = $region56
        $region55: #{tpu_custom_call.1} parent=43 // pred_region
          %s353 = sadd.s32 %s26, %s27
          %s354 = smul.u32 4, %s353
          %p355 = scmp.lt.s32.totalorder %s354, 7
          %s356 = scalar_select %p355, %s354, 7
          %s357 = smul.addr %s356, 8
          %s358 = scalar_lea.vmem %s2, %s357
          %s359 = sadd.s32 %s26, %s27
          %s360 = smul.u32 4, %s359
        $region56: #{tpu_custom_call.1} parent=43 // pred_fallthru
          _
      $region44: #{tpu_custom_call.1} parent=5 // pred_fallthru
        _
      %p361 = scmp.le.s32.totalorder 1, %s19
      %p362 = scmp.lt.s32.totalorder %s19, 3
      %p363 = pnand %p361, %p362
      %p364 = pneg %p363
      // Predicated region
      $region57: #{tpu_custom_call.1} parent=5 // pred_check
        _
      $region58: #{tpu_custom_call.1} parent=5 // pred_check_branch
        %366 = sbr.rel (%p363) target = $region60
      $region59: #{tpu_custom_call.1} parent=5 // pred_region
        %s367 = ssub.s32 %s19, 1
        %s368 = sadd.s32 %s28, %s29
        %s369 = smul.u32 4, %s368
        %p370 = scmp.lt.s32.totalorder %s369, 7
        %s371 = scalar_select %p370, %s369, 7
        %s372 = smul.addr %s371, 8
        %s373 = scalar_lea.vmem %s0, %s372
        %p374 = pneg %p59
        %p375 = pneg %p56
        %s376 = sadd.s32 %s28, %s29
        %s377 = smul.u32 4, %s376
        %p378 = scmp.lt.s32.totalorder %s377, 7
        %s379 = scalar_select %p378, %s377, 7
        %s380 = smul.addr %s379, 8
        %s381 = scalar_lea.vmem %s1, %s380
        %p382 = pneg %p87
        %p383 = pneg %p84
        %s384 = sadd.s32 %s28, %s29
        %s385 = smul.u32 4, %s384
        %p386 = scmp.lt.s32.totalorder %s385, 7
        %s387 = scalar_select %p386, %s385, 7
        %s388 = smul.addr %s387, 8
        %s389 = scalar_lea.vmem %s2, %s388
        %p390 = pneg %p115
        %p391 = pneg %p112
        %p392 = pneg %p136
        %p393 = pneg %p133
        %p394 = pneg %p157
        %p395 = pneg %p154
        %p396 = pneg %p178
        %p397 = pneg %p175
        %p398 = pneg %p199
        %p399 = pneg %p196
        %p400 = pneg %p220
        %p401 = pneg %p217
        %p402 = pneg %p241
        %p403 = pneg %p238
        %p404 = pneg %p262
        %p405 = pneg %p259
        %p406 = pneg %p288
        %p407 = pneg %p285
        %s408 = sand.u32 %s275, 1
        %s409 = scalar_lea.sflag [#allocation3], %s408
        %s410 = sand.u32 %s275, 1
        %s411 = smul.addr %s410, 8
        %s412 = scalar_lea.vmem [#allocation2], %s411
        %s413 = sadd.s32 %s28, %s29
        %s414 = smul.u32 4, %s413
        %p415 = scmp.lt.s32.totalorder %s414, 7
        %s416 = scalar_select %p415, %s414, 7
        %s417 = smul.addr %s416, 8
        %s418 = scalar_lea.vmem %s0, %s417
        %s419 = sadd.s32 %s28, %s29
        %s420 = smul.u32 4, %s419
        %s421 = sadd.s32 %s28, %s29
        %s422 = smul.u32 4, %s421
        %p423 = scmp.lt.s32.totalorder %s422, 7
        %s424 = scalar_select %p423, %s422, 7
        %s425 = smul.addr %s424, 8
        %s426 = scalar_lea.vmem %s1, %s425
        %s427 = sadd.s32 %s28, %s29
        %s428 = smul.u32 4, %s427
        %s429 = sadd.s32 %s28, %s29
        %s430 = smul.u32 4, %s429
        %p431 = scmp.lt.s32.totalorder %s430, 7
        %s432 = scalar_select %p431, %s430, 7
        %s433 = smul.addr %s432, 8
        %s434 = scalar_lea.vmem %s2, %s433
        %s435 = sadd.s32 %s28, %s29
        %s436 = smul.u32 4, %s435
        %p437 = scmp.eq.s32.totalorder %s29, 0
        // Predicated region
        $region61: #{tpu_custom_call.1} parent=59 // pred_check
          %p438 = pneg %p437
        $region62: #{tpu_custom_call.1} parent=59 // pred_check_branch
          %440 = sbr.rel (%p438) target = $region64
        $region63: #{tpu_custom_call.1} parent=59 // pred_region
          %441 = vst [vmem:[%s412] sm:$0xff] -inf
        $region64: #{tpu_custom_call.1} parent=59 // pred_fallthru
          _
        %v442 = vld [vmem:[%s418] sm:$0xff]
        %v443 = vld [vmem:[%s418 + $0x8] sm:$0xff]
        %v444 = vld [vmem:[%s418 + $0x10] sm:$0xff]
        %v445 = vld [vmem:[%s418 + $0x18] sm:$0xff]
        %v446 = vld [vmem:[%s3] sm:$0xf]
        %v447 = vld [vmem:[%s426] sm:$0xff]
        %v448 = vld [vmem:[%s426 + $0x8] sm:$0xff]
        %v449 = vld [vmem:[%s426 + $0x10] sm:$0xff]
        %v450 = vld [vmem:[%s426 + $0x18] sm:$0xff]
        %v451 = vld [vmem:[%s4] sm:$0x7]
        %vm452 = vcmask 23552
        %v454 = vsel %vm452, %v447, 0
        %v457 = vsel %vm452, %v448, 0
        %v460 = vsel %vm452, %v449, 0
        %v463 = vsel %vm452, %v450, 0
        %vm465 = vcmask 1042432
        %v467 = vsel %vm465, %v451, 0
        %469 = vmatprep.subr.mxu0 0.0
        %470 = vmatpush1.msra.mxu0 %v467
        %471 = vmatprep.subr.mxu0 0.0
        %472 = vmatpush1.msra.mxu0 0.0
        %473 = vmatprep.subr.mxu0 0.0
        %474 = vmatpush1.msra.mxu0 0.0
        %475 = vmatprep.subr.mxu0 0.0
        %476 = vmatpush1.msra.mxu0 0.0
        %477 = vmatprep.subr.mxu0 0.0
        %478 = vmatpush1.msra.mxu0 0.0
        %479 = vmatprep.subr.mxu0 0.0
        %480 = vmatpush1.msra.mxu0 0.0
        %481 = vmatprep.subr.mxu0 0.0
        %482 = vmatpush1.msra.mxu0 0.0
        %483 = vmatprep.subr.mxu0 0.0
        %484 = vmatpush1.msra.mxu0 0.0
        %485 = vmatprep.subr.mxu0 0.0
        %486 = vmatpush1.msra.mxu0 0.0
        %487 = vmatprep.subr.mxu0 0.0
        %488 = vmatpush1.msra.mxu0 0.0
        %489 = vmatprep.subr.mxu0 0.0
        %490 = vmatpush1.msra.mxu0 0.0
        %491 = vmatprep.subr.mxu0 0.0
        %492 = vmatpush1.msra.mxu0 0.0
        %493 = vmatprep.subr.mxu0 0.0
        %494 = vmatpush1.msra.mxu0 0.0
        %495 = vmatprep.subr.mxu0 0.0
        %496 = vmatpush1.msra.mxu0 0.0
        %497 = vmatprep.subr.mxu0 0.0
        %498 = vmatpush1.msra.mxu0 0.0
        %499 = vmatprep.subr.mxu0 0.0
        %500 = vmatpush1.msra.mxu0 0.0
        %501 = vmatprep.subr.mxu0 0.0
        %502 = vmatpush1.msra.mxu0 0.0
        %503 = vmatprep.subr.mxu0 0.0
        %504 = vmatpush1.msra.mxu0 0.0
        %505 = vmatprep.subr.mxu0 0.0
        %506 = vmatpush1.msra.mxu0 0.0
        %507 = vmatprep.subr.mxu0 0.0
        %508 = vmatpush1.msra.mxu0 0.0
        %509 = vmatprep.subr.mxu0 0.0
        %510 = vmatpush1.msra.mxu0 0.0
        %511 = vmatprep.subr.mxu0 0.0
        %512 = vmatpush1.msra.mxu0 0.0
        %513 = vmatprep.subr.mxu0 0.0
        %514 = vmatpush1.msra.mxu0 0.0
        %515 = vmatprep.subr.mxu0 0.0
        %516 = vmatpush1.msra.mxu0 0.0
        %517 = vmatprep.subr.mxu0 0.0
        %518 = vmatpush1.msra.mxu0 0.0
        %519 = vmatprep.subr.mxu0 0.0
        %520 = vmatpush1.msra.mxu0 0.0
        %521 = vmatprep.subr.mxu0 0.0
        %522 = vmatpush1.msra.mxu0 0.0
        %523 = vmatprep.subr.mxu0 0.0
        %524 = vmatpush1.msra.mxu0 0.0
        %525 = vmatprep.subr.mxu0 0.0
        %526 = vmatpush1.msra.mxu0 0.0
        %527 = vmatprep.subr.mxu0 0.0
        %528 = vmatpush1.msra.mxu0 0.0
        %529 = vmatprep.subr.mxu0 0.0
        %530 = vmatpush1.msra.mxu0 0.0
        %531 = vmatprep.subr.mxu0 0.0
        %532 = vmatpush1.msra.mxu0 0.0
        %533 = vmatprep.mubr.f32.mxu0 0.0
        %534 = vmatmul.mubr.f32.gmra.mrb[0].mxu0 %v454
        %v535 = vpop.f32.mrb[0].mxu0
        %v536 = vadd.f32 0.0, %v535
        %v537 = vpop.f32.mrb[0].mxu0
        %538 = vmatprep.mubr.f32.mxu0 0.0
        %539 = vmatmul.mubr.f32.gmra.mrb[0].mxu0 %v457
        %v540 = vpop.f32.mrb[0].mxu0
        %v541 = vadd.f32 0.0, %v540
        %v542 = vpop.f32.mrb[0].mxu0
        %543 = vmatprep.mubr.f32.mxu0 0.0
        %544 = vmatmul.mubr.f32.gmra.mrb[0].mxu0 %v460
        %v545 = vpop.f32.mrb[0].mxu0
        %v546 = vadd.f32 0.0, %v545
        %v547 = vpop.f32.mrb[0].mxu0
        %548 = vmatprep.mubr.f32.mxu0 0.0
        %549 = vmatmul.mubr.f32.gmra.mrb[0].mxu0 %v463
        %v550 = vpop.f32.mrb[0].mxu0
        %v551 = vadd.f32 0.0, %v550
        %v552 = vpop.f32.mrb[0].mxu0
        %553 = vdwg.mxu0
        %vm554 = vcmask 31744
        %v556 = vsel %vm554, %v442, 0
        %v559 = vsel %vm554, %v443, 0
        %v562 = vsel %vm554, %v444, 0
        %v565 = vsel %vm554, %v445, 0
        %vm567 = vcmask 1043456
        %v569 = vsel %vm567, %v446, 0
        %571 = vmatprep.subr.mxu0 0.0
        %572 = vmatpush1.msra.mxu0 %v569
        %573 = vmatprep.subr.mxu0 0.0
        %574 = vmatpush1.msra.mxu0 0.0
        %575 = vmatprep.subr.mxu0 0.0
        %576 = vmatpush1.msra.mxu0 0.0
        %577 = vmatprep.subr.mxu0 0.0
        %578 = vmatpush1.msra.mxu0 0.0
        %579 = vmatprep.subr.mxu0 0.0
        %580 = vmatpush1.msra.mxu0 0.0
        %581 = vmatprep.subr.mxu0 0.0
        %582 = vmatpush1.msra.mxu0 0.0
        %583 = vmatprep.subr.mxu0 0.0
        %584 = vmatpush1.msra.mxu0 0.0
        %585 = vmatprep.subr.mxu0 0.0
        %586 = vmatpush1.msra.mxu0 0.0
        %587 = vmatprep.subr.mxu0 0.0
        %588 = vmatpush1.msra.mxu0 0.0
        %589 = vmatprep.subr.mxu0 0.0
        %590 = vmatpush1.msra.mxu0 0.0
        %591 = vmatprep.subr.mxu0 0.0
        %592 = vmatpush1.msra.mxu0 0.0
        %593 = vmatprep.subr.mxu0 0.0
        %594 = vmatpush1.msra.mxu0 0.0
        %595 = vmatprep.subr.mxu0 0.0
        %596 = vmatpush1.msra.mxu0 0.0
        %597 = vmatprep.subr.mxu0 0.0
        %598 = vmatpush1.msra.mxu0 0.0
        %599 = vmatprep.subr.mxu0 0.0
        %600 = vmatpush1.msra.mxu0 0.0
        %601 = vmatprep.subr.mxu0 0.0
        %602 = vmatpush1.msra.mxu0 0.0
        %603 = vmatprep.subr.mxu0 0.0
        %604 = vmatpush1.msra.mxu0 0.0
        %605 = vmatprep.subr.mxu0 0.0
        %606 = vmatpush1.msra.mxu0 0.0
        %607 = vmatprep.subr.mxu0 0.0
        %608 = vmatpush1.msra.mxu0 0.0
        %609 = vmatprep.subr.mxu0 0.0
        %610 = vmatpush1.msra.mxu0 0.0
        %611 = vmatprep.subr.mxu0 0.0
        %612 = vmatpush1.msra.mxu0 0.0
        %613 = vmatprep.subr.mxu0 0.0
        %614 = vmatpush1.msra.mxu0 0.0
        %615 = vmatprep.subr.mxu0 0.0
        %616 = vmatpush1.msra.mxu0 0.0
        %617 = vmatprep.subr.mxu0 0.0
        %618 = vmatpush1.msra.mxu0 0.0
        %619 = vmatprep.subr.mxu0 0.0
        %620 = vmatpush1.msra.mxu0 0.0
        %621 = vmatprep.subr.mxu0 0.0
        %622 = vmatpush1.msra.mxu0 0.0
        %623 = vmatprep.subr.mxu0 0.0
        %624 = vmatpush1.msra.mxu0 0.0
        %625 = vmatprep.subr.mxu0 0.0
        %626 = vmatpush1.msra.mxu0 0.0
        %627 = vmatprep.subr.mxu0 0.0
        %628 = vmatpush1.msra.mxu0 0.0
        %629 = vmatprep.subr.mxu0 0.0
        %630 = vmatpush1.msra.mxu0 0.0
        %631 = vmatprep.subr.mxu0 0.0
        %632 = vmatpush1.msra.mxu0 0.0
        %633 = vmatprep.subr.mxu0 0.0
        %634 = vmatpush1.msra.mxu0 0.0
        %635 = vmatprep.mubr.f32.mxu0 0.0
        %636 = vmatmul.mubr.f32.gmra.mrb[0].mxu0 %v556
        %v637 = vpop.f32.mrb[0].mxu0
        %v638 = vadd.f32 %v536, %v637
        %v639 = vpop.f32.mrb[0].mxu0
        %640 = vmatprep.mubr.f32.mxu0 0.0
        %641 = vmatmul.mubr.f32.gmra.mrb[0].mxu0 %v559
        %v642 = vpop.f32.mrb[0].mxu0
        %v643 = vadd.f32 %v541, %v642
        %v644 = vpop.f32.mrb[0].mxu0
        %645 = vmatprep.mubr.f32.mxu0 0.0
        %646 = vmatmul.mubr.f32.gmra.mrb[0].mxu0 %v562
        %v647 = vpop.f32.mrb[0].mxu0
        %v648 = vadd.f32 %v546, %v647
        %v649 = vpop.f32.mrb[0].mxu0
        %650 = vmatprep.mubr.f32.mxu0 0.0
        %651 = vmatmul.mubr.f32.gmra.mrb[0].mxu0 %v565
        %v652 = vpop.f32.mrb[0].mxu0
        %v653 = vadd.f32 %v551, %v652
        %v654 = vpop.f32.mrb[0].mxu0
        %655 = vdwg.mxu0
        %v656 = vld [vmem:[%s5] sm:$0x1]
        %v658 = vlaneseq
        %v659 = vshrl.u32 %v658, 7
        %v660 = vsub.s32 0, %v659
        %v661 = vrot.slane %v656, %v660
        %v663 = vadd.f32 %v638, %v661
        %v664 = vadd.f32 %v643, %v661
        %v665 = vadd.f32 %v648, %v661
        %v666 = vadd.f32 %v653, %v661
        %v667 = vmax.f32 %v663, 0.0
        %v668 = vmax.f32 %v664, 0.0
        %v669 = vmax.f32 %v665, 0.0
        %v670 = vmax.f32 %v666, 0.0
        %v671 = vld [vmem:[%s6] sm:$0xff]
        %v672 = vld [vmem:[%s6 + $0x8] sm:$0xff]
        %v673 = vld [vmem:[%s6 + $0x10] sm:$0xff]
        %v674 = vld [vmem:[%s6 + $0x18] sm:$0xff]
        %v675 = vld [vmem:[%s6 + $0x20] sm:$0xff]
        %v676 = vld [vmem:[%s6 + $0x28] sm:$0xff]
        %v677 = vld [vmem:[%s6 + $0x30] sm:$0xff]
        %v678 = vld [vmem:[%s6 + $0x38] sm:$0xff]
        %v679 = vld [vmem:[%s6 + $0x40] sm:$0xff]
        %v680 = vld [vmem:[%s6 + $0x48] sm:$0xff]
        %v681 = vld [vmem:[%s6 + $0x50] sm:$0xff]
        %v682 = vld [vmem:[%s6 + $0x58] sm:$0xff]
        %v683 = vld [vmem:[%s6 + $0x60] sm:$0xff]
        %v684 = vld [vmem:[%s6 + $0x68] sm:$0xff]
        %v685 = vld [vmem:[%s6 + $0x70] sm:$0xff]
        %v686 = vld [vmem:[%s6 + $0x78] sm:$0xff]
        %v687 = vld [vmem:[%s7] sm:$0x1]
        %v689 = vlaneseq
        %v690 = vshrl.u32 %v689, 7
        %v691 = vsub.s32 0, %v690
        %v692 = vrot.slane %v687, %v691
        %694 = vmatprep.subr.mxu0 0.0
        %695 = vmatpush1.msra.mxu0 %v671
        %696 = vmatprep.subr.mxu0 0.0
        %697 = vmatpush1.msra.mxu0 %v672
        %698 = vmatprep.subr.mxu0 0.0
        %699 = vmatpush1.msra.mxu0 %v673
        %700 = vmatprep.subr.mxu0 0.0
        %701 = vmatpush1.msra.mxu0 %v674
        %702 = vmatprep.subr.mxu0 0.0
        %703 = vmatpush1.msra.mxu0 %v675
        %704 = vmatprep.subr.mxu0 0.0
        %705 = vmatpush1.msra.mxu0 %v676
        %706 = vmatprep.subr.mxu0 0.0
        %707 = vmatpush1.msra.mxu0 %v677
        %708 = vmatprep.subr.mxu0 0.0
        %709 = vmatpush1.msra.mxu0 %v678
        %710 = vmatprep.subr.mxu0 0.0
        %711 = vmatpush1.msra.mxu0 %v679
        %712 = vmatprep.subr.mxu0 0.0
        %713 = vmatpush1.msra.mxu0 %v680
        %714 = vmatprep.subr.mxu0 0.0
        %715 = vmatpush1.msra.mxu0 %v681
        %716 = vmatprep.subr.mxu0 0.0
        %717 = vmatpush1.msra.mxu0 %v682
        %718 = vmatprep.subr.mxu0 0.0
        %719 = vmatpush1.msra.mxu0 %v683
        %720 = vmatprep.subr.mxu0 0.0
        %721 = vmatpush1.msra.mxu0 %v684
        %722 = vmatprep.subr.mxu0 0.0
        %723 = vmatpush1.msra.mxu0 %v685
        %724 = vmatprep.subr.mxu0 0.0
        %725 = vmatpush1.msra.mxu0 %v686
        %726 = vmatprep.subr.mxu0 0.0
        %727 = vmatpush1.msra.mxu0 0.0
        %728 = vmatprep.subr.mxu0 0.0
        %729 = vmatpush1.msra.mxu0 0.0
        %730 = vmatprep.subr.mxu0 0.0
        %731 = vmatpush1.msra.mxu0 0.0
        %732 = vmatprep.subr.mxu0 0.0
        %733 = vmatpush1.msra.mxu0 0.0
        %734 = vmatprep.subr.mxu0 0.0
        %735 = vmatpush1.msra.mxu0 0.0
        %736 = vmatprep.subr.mxu0 0.0
        %737 = vmatpush1.msra.mxu0 0.0
        %738 = vmatprep.subr.mxu0 0.0
        %739 = vmatpush1.msra.mxu0 0.0
        %740 = vmatprep.subr.mxu0 0.0
        %741 = vmatpush1.msra.mxu0 0.0
        %742 = vmatprep.subr.mxu0 0.0
        %743 = vmatpush1.msra.mxu0 0.0
        %744 = vmatprep.subr.mxu0 0.0
        %745 = vmatpush1.msra.mxu0 0.0
        %746 = vmatprep.subr.mxu0 0.0
        %747 = vmatpush1.msra.mxu0 0.0
        %748 = vmatprep.subr.mxu0 0.0
        %749 = vmatpush1.msra.mxu0 0.0
        %750 = vmatprep.subr.mxu0 0.0
        %751 = vmatpush1.msra.mxu0 0.0
        %752 = vmatprep.subr.mxu0 0.0
        %753 = vmatpush1.msra.mxu0 0.0
        %754 = vmatprep.subr.mxu0 0.0
        %755 = vmatpush1.msra.mxu0 0.0
        %756 = vmatprep.subr.mxu0 0.0
        %757 = vmatpush1.msra.mxu0 0.0
        %758 = vmatprep.mubr.f32.mxu0 0.0
        %759 = vmatmul.mubr.f32.gmra.mrb[0].mxu0 %v667
        %v760 = vpop.f32.mrb[0].mxu0
        %v761 = vadd.f32 %v692, %v760
        %v762 = vpop.f32.mrb[0].mxu0
        %763 = vmatprep.mubr.f32.mxu0 0.0
        %764 = vmatmul.mubr.f32.gmra.mrb[0].mxu0 %v668
        %v765 = vpop.f32.mrb[0].mxu0
        %v766 = vadd.f32 %v692, %v765
        %v767 = vpop.f32.mrb[0].mxu0
        %768 = vmatprep.mubr.f32.mxu0 0.0
        %769 = vmatmul.mubr.f32.gmra.mrb[0].mxu0 %v669
        %v770 = vpop.f32.mrb[0].mxu0
        %v771 = vadd.f32 %v692, %v770
        %v772 = vpop.f32.mrb[0].mxu0
        %773 = vmatprep.mubr.f32.mxu0 0.0
        %774 = vmatmul.mubr.f32.gmra.mrb[0].mxu0 %v670
        %v775 = vpop.f32.mrb[0].mxu0
        %v776 = vadd.f32 %v692, %v775
        %v777 = vpop.f32.mrb[0].mxu0
        %778 = vdwg.mxu0
        %v779 = vld [vmem:[%s434] sm:$0xff]
        %v780 = vld [vmem:[%s434 + $0x8] sm:$0xff]
        %v781 = vld [vmem:[%s434 + $0x10] sm:$0xff]
        %v782 = vld [vmem:[%s434 + $0x18] sm:$0xff]
        %vm783 = vcmp.eq.s32.totalorder %v779, 0
        %vm784 = vcmp.eq.s32.totalorder %v780, 0
        %vm785 = vcmp.eq.s32.totalorder %v781, 0
        %vm786 = vcmp.eq.s32.totalorder %v782, 0
        %v787 = vsel %vm783, 1, 0
        %v788 = vsel %vm784, 1, 0
        %v789 = vsel %vm785, 1, 0
        %v790 = vsel %vm786, 1, 0
        %791 = vset.pattern.permute.xlu0 0
        %792 = vperm.xlu0 %791, %v787
        %v793 = vpop.permute.xlu0 %792
        %794 = vset.pattern.permute.xlu0 0
        %795 = vperm.xlu0 %794, %v788
        %v796 = vpop.permute.xlu0 %795
        %797 = vset.pattern.permute.xlu0 0
        %798 = vperm.xlu0 %797, %v789
        %v799 = vpop.permute.xlu0 %798
        %800 = vset.pattern.permute.xlu0 0
        %801 = vperm.xlu0 %800, %v790
        %v802 = vpop.permute.xlu0 %801
        %vm803 = vcmp.eq.s32.totalorder %v793, 1
        %vm804 = vcmp.eq.s32.totalorder %v796, 1
        %vm805 = vcmp.eq.s32.totalorder %v799, 1
        %vm806 = vcmp.eq.s32.totalorder %v802, 1
        %v807 = vsel %vm803, %v761, -inf
        %v808 = vsel %vm804, %v766, -inf
        %v809 = vsel %vm805, %v771, -inf
        %v810 = vsel %vm806, %v776, -inf
        %v811 = vmax.f32 %v807, %v808
        %v812 = vmax.f32 %v809, %v810
        %v813 = vmax.f32 %v811, %v812
        %v814 = vrot.slane %v813, 4
        %v815 = vmax.f32 %v813, %v814
        %v816 = vrot.slane %v815, 2
        %v817 = vmax.f32 %v815, %v816
        %v818 = vrot.slane %v817, 1
        %v819 = vmax.f32 %v817, %v818
        %vm820 = vcmp.eq.s32.totalorder %v779, 1
        %vm821 = vcmp.eq.s32.totalorder %v780, 1
        %vm822 = vcmp.eq.s32.totalorder %v781, 1
        %vm823 = vcmp.eq.s32.totalorder %v782, 1
        %v824 = vsel %vm820, 1, 0
        %v825 = vsel %vm821, 1, 0
        %v826 = vsel %vm822, 1, 0
        %v827 = vsel %vm823, 1, 0
        %828 = vset.pattern.permute.xlu0 0
        %829 = vperm.xlu0 %828, %v824
        %v830 = vpop.permute.xlu0 %829
        %831 = vset.pattern.permute.xlu0 0
        %832 = vperm.xlu0 %831, %v825
        %v833 = vpop.permute.xlu0 %832
        %834 = vset.pattern.permute.xlu0 0
        %835 = vperm.xlu0 %834, %v826
        %v836 = vpop.permute.xlu0 %835
        %837 = vset.pattern.permute.xlu0 0
        %838 = vperm.xlu0 %837, %v827
        %v839 = vpop.permute.xlu0 %838
        %vm840 = vcmp.eq.s32.totalorder %v830, 1
        %vm841 = vcmp.eq.s32.totalorder %v833, 1
        %vm842 = vcmp.eq.s32.totalorder %v836, 1
        %vm843 = vcmp.eq.s32.totalorder %v839, 1
        %v844 = vsel %vm840, %v761, -inf
        %v845 = vsel %vm841, %v766, -inf
        %v846 = vsel %vm842, %v771, -inf
        %v847 = vsel %vm843, %v776, -inf
        %v848 = vmax.f32 %v844, %v845
        %v849 = vmax.f32 %v846, %v847
        %v850 = vmax.f32 %v848, %v849
        %v851 = vrot.slane %v850, 4
        %v852 = vmax.f32 %v850, %v851
        %v853 = vrot.slane %v852, 2
        %v854 = vmax.f32 %v852, %v853
        %v855 = vrot.slane %v854, 1
        %v856 = vmax.f32 %v854, %v855
        %vm857 = vcmask 1040384
        %v858 = vsel %vm857, %v819, %v856
        %vm859 = vcmask 1041408
        %v860 = vsel %vm859, %v858, -inf
        %v861 = vsel %vm465, %v860, -inf
        %v862 = vsel %vm567, %v861, -inf
        %vm863 = vcmask 1044480
        %v864 = vsel %vm863, %v862, -inf
        %vm865 = vcmask 1045504
        %v866 = vsel %vm865, %v864, -inf
        %vm867 = vcmask 1046528
        %v868 = vsel %vm867, %v866, -inf
        %v869 = vld [vmem:[%s412] sm:$0xff]
        %v870 = vmax.f32 %v869, %v868
        %871 = vst [vmem:[%s412] sm:$0xff] %v870
        %s872 = sand.u32 %s275, 1
        %s873 = scalar_lea.sflag [#allocation3], %s872
        %s874 = sand.u32 %s275, 1
        %s875 = smul.addr %s874, 8
        %s876 = scalar_lea.vmem [#allocation2], %s875
        // Predicated region
        $region65: #{tpu_custom_call.1} parent=59 // pred_check
          %p877 = pneg %p285
        $region66: #{tpu_custom_call.1} parent=59 // pred_check_branch
          %879 = sbr.rel (%p877) target = $region68
        $region67: #{tpu_custom_call.1} parent=59 // pred_region
          %s881 = ssub.s32 128, 128
          %882 = vsyncadd %s873, %s881
          %s883 = smul.addr %s28, 128
          %s884 = scalar_lea.hbm %s10, %s883
          %s886 = sshll.u32 %s876, 4
          %s887 = int_to_ptr.vmem [resolvable:$true] %s886
          %889 = dma.vmem_to_hbm [thread:$0]  %s887, 128, %s884, %s873
        $region68: #{tpu_custom_call.1} parent=59 // pred_fallthru
          _
      $region60: #{tpu_custom_call.1} parent=5 // pred_fallthru
        _
      %p890 = scmp.le.s32.totalorder 2, %s19
      // Predicated region
      $region69: #{tpu_custom_call.1} parent=5 // pred_check
        %p891 = pneg %p890
      $region70: #{tpu_custom_call.1} parent=5 // pred_check_branch
        %893 = sbr.rel (%p891) target = $region72
      $region71: #{tpu_custom_call.1} parent=5 // pred_region
        %s894 = ssub.s32 %s19, 2
        // Predicated region
        $region73: #{tpu_custom_call.1} parent=71 // pred_check
          %p895 = pneg %p291
        $region74: #{tpu_custom_call.1} parent=71 // pred_check_branch
          %897 = sbr.rel (%p895) target = $region76
        $region75: #{tpu_custom_call.1} parent=71 // pred_region
          %s898 = sand.u32 %s276, 1
          %s899 = scalar_lea.sflag [#allocation3], %s898
          %s900 = sand.u32 %s276, 1
          %s901 = smul.addr %s900, 8
          %s902 = scalar_lea.vmem [#allocation2], %s901
          %903 = dma.done %s899, 128
        $region76: #{tpu_custom_call.1} parent=71 // pred_fallthru
          _
      $region72: #{tpu_custom_call.1} parent=5 // pred_fallthru
        _
    $region6: #{tpu_custom_call.1} parent=1 // loop_footer
      %s23 = sadd.s32 1, %s19
    $region7: #{tpu_custom_call.1} parent=1 // loop_footer_branch
      %18 = sbr.rel target = $region3
    $region8: #{tpu_custom_call.1} parent=1 // loop_exit
      _
    %904 = vsyncpa [#allocation3], 1
    %s905 = scalar_lea.sflag [#allocation3], 1
    %906 = vsyncpa %s905, 1

</llo_original>
